<compile_context>
chip_gen: v5e
topology: v5e:2x2
jax: 0.10.0
libtpu: 0.0.40
codegen_flags: <defaults>
</compile_context>

<pallas_src>
import functools

import jax
import jax.numpy as jnp
from jax.experimental import pallas as pl
from jax.experimental.pallas import tpu as pltpu


# --------------------------------------------------------------------------
# Capability probe: does Mosaic lower a lane-axis reverse (lax.rev) for this
# (width, dtype)?  Cheap one-block compile, cached; falls back to MXU path.
# --------------------------------------------------------------------------
def _rev_probe_kernel(x_ref, o_ref):
    o_ref[...] = jnp.flip(x_ref[...], axis=-1)


@functools.lru_cache(maxsize=None)
def _lane_reverse_supported(w: int, dtype_name: str) -> bool:
    dtype = jnp.dtype(dtype_name)
    try:
        fn = pl.pallas_call(
            _rev_probe_kernel,
            out_shape=jax.ShapeDtypeStruct((8, w), dtype),
        )
        jax.jit(fn).lower(jax.ShapeDtypeStruct((8, w), dtype)).compile()
        return True
    except Exception:  # Mosaic lowering / compile rejected lax.rev
        return False


# --------------------------------------------------------------------------
# Tiling helpers.
# --------------------------------------------------------------------------
def _pick_chunk(w: int) -> int:
    """Lane chunk for the MXU-fallback permutation matmul."""
    if w < 128:
        return w
    kind = jax.devices()[0].device_kind.lower()
    # v6e / v7x have a 256x256 MXU; v5e and older are 128-wide.
    prefer_256 = not any(t in kind for t in ("v2", "v3", "v4", "v5"))
    if prefer_256 and w % 256 == 0:
        return 256
    return 128


def _pick_tile_rows(rows: int, w: int, itemsize: int) -> int:
    # ~2 MiB per (TILE_R, W) block; input + output, each double-buffered,
    # stays around 8 MiB -- safe against scoped VMEM defaults on v5e (16 MiB),
    # v6e (32 MiB) and v7x (32 MiB scoped / 64 MiB physical).
    budget_bytes = 2 << 20
    t = max(1, budget_bytes // max(1, w * itemsize))
    t = min(t, rows)
    # Keep at least 2 row tiles so ("parallel",) can shard across v7x's 2 TCs.
    if rows >= 16:
        t = min(t, pl.cdiv(rows, 2))
    if rows >= 8:
        t = max(8, (t // 8) * 8)  # sublane-aligned tile
    else:
        t = rows                  # tiny input: block == full dim
    return t


# --------------------------------------------------------------------------
# The kernel: reverse the last axis of a (rows, W) slab.
# --------------------------------------------------------------------------
def _hflip_last_axis_2d(x2d, *, chunk: int, use_rev: bool):
    rows, w = x2d.shape
    assert w % chunk == 0
    n_w = w // chunk
    tile_r = _pick_tile_rows(rows, w, x2d.dtype.itemsize)

    if use_rev:
        def kernel(x_ref, o_ref):
            # Whole-W reverse on the XLU; one contiguous, lane-dense store.
            o_ref[...] = jnp.flip(x_ref[...], axis=-1)
    else:
        def kernel(x_ref, o_ref):
            # MXU fallback: reverse each `chunk`-wide slab with a 0/1
            # permutation matmul, then write it at the mirrored offset inside
            # the same full-W block (chunk-order reversal is just the slice).
            is_float = jnp.issubdtype(x_ref.dtype, jnp.floating)
            mm_dtype = x_ref.dtype if is_float else jnp.float32
            r_i = jax.lax.broadcasted_iota(jnp.int32, (chunk, chunk), 0)
            c_i = jax.lax.broadcasted_iota(jnp.int32, (chunk, chunk), 1)
            perm = jnp.where(r_i == (chunk - 1) - c_i, 1.0, 0.0).astype(mm_dtype)
            for j in range(n_w):
                src = x_ref[:, j * chunk:(j + 1) * chunk]
                y = jax.lax.dot(
                    src.astype(mm_dtype), perm,
                    precision=jax.lax.Precision.HIGHEST,
                    preferred_element_type=jnp.float32,
                )
                if not is_float:
                    # Exact for |label| < 2^24: covers any realistic
                    # segmentation label space.
                    y = jnp.round(y)
                lo = (n_w - 1 - j) * chunk
                o_ref[:, lo:lo + chunk] = y.astype(o_ref.dtype)

    return pl.pallas_call(
        kernel,
        out_shape=jax.ShapeDtypeStruct(x2d.shape, x2d.dtype),
        grid_spec=pl.GridSpec(
            grid=(pl.cdiv(rows, tile_r),),
            in_specs=[pl.BlockSpec((tile_r, w), lambda r: (r, 0))],
            out_specs=pl.BlockSpec((tile_r, w), lambda r: (r, 0)),
        ),
        compiler_params=pltpu.CompilerParams(
            dimension_semantics=("parallel",),
        ),
    )(x2d)


# --------------------------------------------------------------------------
# Module-equivalent wrapper.
# --------------------------------------------------------------------------
def random_horizontal_flip(image, mask, flip_flag):
    """image: (N, C, H, W); mask: (N, H, W) int; flip_flag: (1,) int32
    Bernoulli(p) draw (the `torch.rand(1) < p` coin toss, one per call)."""
    n, c, h, w = image.shape
    nm, hm, wm = mask.shape
    assert (n, h, w) == (nm, hm, wm)

    def flip_one(x):
        x2d = x.reshape(-1, w)
        ww, pad = w, 0
        if w >= 128 and w % 128 != 0:
            # Pad W up to a lane multiple so blocks stay lane-dense and the
            # MXU fallback stays at O(chunk) MACs/element.
            # TODO(synk): fold the remainder chunk into the kernel (mirrored
            # output slices) to avoid the pad/slice HBM copies.
            ww = pl.cdiv(w, 128) * 128
            pad = ww - w
            x2d = jnp.pad(x2d, ((0, 0), (0, pad)))
        chunk = _pick_chunk(ww)
        use_rev = _lane_reverse_supported(ww, x2d.dtype.name)
        out2d = _hflip_last_axis_2d(x2d, chunk=chunk, use_rev=use_rev)
        if pad:
            out2d = out2d[:, pad:]
        return out2d.reshape(x.shape)

    def flip_path(img, msk):
        return flip_one(img), flip_one(msk)

    def no_flip_path(img, msk):
        return img, msk

    # Coin toss decided outside the kernel: the no-flip branch does no kernel
    # work, and with donated inputs XLA can alias it straight through.
    return jax.lax.cond(flip_flag[0] != 0, flip_path, no_flip_path, image, mask)


if __name__ == "__main__":
    p = 0.5
    key = jax.random.PRNGKey(0)
    k_img, k_mask, k_flip = jax.random.split(key, 3)

    N, C, H, W = 2, 4, 16, 16
    image = jax.random.normal(k_img, (N, C, H, W), dtype=jnp.float32)
    mask = jax.random.randint(k_mask, (N, H, W), 0, 21, dtype=jnp.int32)

    flip_fn = jax.jit(random_horizontal_flip)

    # Exercise both branches deterministically.
    for flag_val in (1, 0):
        flag = jnp.array([flag_val], dtype=jnp.int32)
        out_img, out_mask = flip_fn(image, mask, flag)
        jax.block_until_ready((out_img, out_mask))
        if flag_val:
            ref_img, ref_mask = jnp.flip(image, axis=-1), jnp.flip(mask, axis=-1)
        else:
            ref_img, ref_mask = image, mask
        assert jnp.allclose(out_img, ref_img), "image flip mismatch"
        assert jnp.array_equal(out_mask, ref_mask), "mask flip mismatch"

    # torch.rand(1) < self.p  -> Bernoulli(p) coin toss, once per call.
    # Donating the inputs lets XLA alias them through the no-flip branch
    # (no HBM copy for ~half the calls at p=0.5).
    flip_fn_donated = jax.jit(random_horizontal_flip, donate_argnums=(0, 1))
    flip_flag = (jax.random.uniform(k_flip, (1,)) < p).astype(jnp.int32)
    out_img, out_mask = flip_fn_donated(jnp.array(image), jnp.array(mask), flip_flag)
    jax.block_until_ready((out_img, out_mask))

    print("KERNEL_OK")
</pallas_src>

<mosaic_0001>
module attributes {stable_mosaic.version = 11 : i64} {
  func.func @kernel(%arg0: i32, %arg1: memref<16x16xi32, #tpu.memory_space<vmem>>, %arg2: memref<16x16xi32, #tpu.memory_space<vmem>>) attributes {dimension_semantics = [#tpu.dimension_semantics<parallel>], iteration_bounds = array<i64: 2>, scalar_prefetch = 0 : i64, scratch_operands = 0 : i64, tpu.core_type = #tpu.core_type<tc>, window_params = [{transform_indices = @transform_0, window_bounds = array<i64: 16, 16>}, {transform_indices = @transform_1, window_bounds = array<i64: 16, 16>}]} {
    %0 = tpu.iota {dimensions = array<i32: 0>} : vector<16x16xi32>
    %1 = tpu.iota {dimensions = array<i32: 1>} : vector<16x16xi32>
    %c15_i32 = arith.constant 15 : i32
    %2 = vector.broadcast %c15_i32 : i32 to vector<16x16xi32>
    %3 = arith.subi %2, %1 : vector<16x16xi32>
    %4 = arith.cmpi eq, %0, %3 : vector<16x16xi32>
    %cst = arith.constant 1.000000e+00 : f32
    %cst_0 = arith.constant 0.000000e+00 : f32
    %5 = vector.broadcast %cst : f32 to vector<16x16xf32>
    %6 = vector.broadcast %cst_0 : f32 to vector<16x16xf32>
    %7 = arith.select %4, %5, %6 : vector<16x16xi1>, vector<16x16xf32>
    %c0 = arith.constant 0 : index
    %c0_1 = arith.constant 0 : index
    %8 = vector.load %arg1[%c0, %c0_1] : memref<16x16xi32, #tpu.memory_space<vmem>>, vector<16x16xi32>
    %9 = arith.sitofp %8 : vector<16x16xi32> to vector<16x16xf32>
    %cst_2 = arith.constant dense<0.000000e+00> : vector<16x16xf32>
    %10 = tpu.matmul %9, %7, %cst_2 {dimension_numbers = #tpu.dot_dimension_numbers<[1], [0], [0], [1], [0, 0, 1, 1], [], []>, precision = #tpu.contract_precision<fp32>} : vector<16x16xf32>, vector<16x16xf32>, vector<16x16xf32> -> vector<16x16xf32>
    %11 = math.roundeven %10 : vector<16x16xf32>
    %12 = arith.fptosi %11 : vector<16x16xf32> to vector<16x16xi32>
    %c0_3 = arith.constant 0 : index
    %c0_4 = arith.constant 0 : index
    %13 = vector.load %arg2[%c0_3, %c0_4] : memref<16x16xi32, #tpu.memory_space<vmem>>, vector<16x16xi32>
    tpu.vector_store %arg2[%c0_3, %c0_4], %12 {strides = array<i32>} : memref<16x16xi32, #tpu.memory_space<vmem>>, vector<16x16xi32>,
    return
  }
  func.func @transform_0(%arg0: i32) -> (i32, i32) {
    %c0_i32 = arith.constant 0 : i32
    %c0_i32_0 = arith.constant 0 : i32
    return %arg0, %c0_i32 : i32, i32
  }
  func.func @transform_1(%arg0: i32) -> (i32, i32) {
    %c0_i32 = arith.constant 0 : i32
    %c0_i32_0 = arith.constant 0 : i32
    return %arg0, %c0_i32 : i32, i32
  }
}

module attributes {stable_mosaic.version = 11 : i64} {
  func.func @kernel(%arg0: i32, %arg1: memref<64x16xf32, #tpu.memory_space<vmem>>, %arg2: memref<64x16xf32, #tpu.memory_space<vmem>>) attributes {dimension_semantics = [#tpu.dimension_semantics<parallel>], iteration_bounds = array<i64: 2>, scalar_prefetch = 0 : i64, scratch_operands = 0 : i64, tpu.core_type = #tpu.core_type<tc>, window_params = [{transform_indices = @transform_0, window_bounds = array<i64: 64, 16>}, {transform_indices = @transform_1, window_bounds = array<i64: 64, 16>}]} {
    %0 = tpu.iota {dimensions = array<i32: 0>} : vector<16x16xi32>
    %1 = tpu.iota {dimensions = array<i32: 1>} : vector<16x16xi32>
    %c15_i32 = arith.constant 15 : i32
    %2 = vector.broadcast %c15_i32 : i32 to vector<16x16xi32>
    %3 = arith.subi %2, %1 : vector<16x16xi32>
    %4 = arith.cmpi eq, %0, %3 : vector<16x16xi32>
    %cst = arith.constant 1.000000e+00 : f32
    %cst_0 = arith.constant 0.000000e+00 : f32
    %5 = vector.broadcast %cst : f32 to vector<16x16xf32>
    %6 = vector.broadcast %cst_0 : f32 to vector<16x16xf32>
    %7 = arith.select %4, %5, %6 : vector<16x16xi1>, vector<16x16xf32>
    %c0 = arith.constant 0 : index
    %c0_1 = arith.constant 0 : index
    %8 = vector.load %arg1[%c0, %c0_1] : memref<64x16xf32, #tpu.memory_space<vmem>>, vector<64x16xf32>
    %cst_2 = arith.constant dense<0.000000e+00> : vector<64x16xf32>
    %9 = tpu.matmul %8, %7, %cst_2 {dimension_numbers = #tpu.dot_dimension_numbers<[1], [0], [0], [1], [0, 0, 1, 1], [], []>, precision = #tpu.contract_precision<fp32>} : vector<64x16xf32>, vector<16x16xf32>, vector<64x16xf32> -> vector<64x16xf32>
    %c0_3 = arith.constant 0 : index
    %c0_4 = arith.constant 0 : index
    %10 = vector.load %arg2[%c0_3, %c0_4] : memref<64x16xf32, #tpu.memory_space<vmem>>, vector<64x16xf32>
    tpu.vector_store %arg2[%c0_3, %c0_4], %9 {strides = array<i32>} : memref<64x16xf32, #tpu.memory_space<vmem>>, vector<64x16xf32>,
    return
  }
  func.func @transform_0(%arg0: i32) -> (i32, i32) {
    %c0_i32 = arith.constant 0 : i32
    %c0_i32_0 = arith.constant 0 : i32
    return %arg0, %c0_i32 : i32, i32
  }
  func.func @transform_1(%arg0: i32) -> (i32, i32) {
    %c0_i32 = arith.constant 0 : i32
    %c0_i32_0 = arith.constant 0 : i32
    return %arg0, %c0_i32 : i32, i32
  }
}

</mosaic_0001>

<llo_original>
// kernel: branch_1_fun.3
$region0: #{branch_1_fun.3}
  #allocation0 [shape = 'u32[]', space=smem, size = 0x4, offset = 0x4, fixed_abs, tag = 'smem constant byte address 0x4 - core index']
  #allocation1 [shape = 'u32[72,128]{1,0:T(1,128)}', space=vmem, size = 0x9000, scoped, tag = 'internal scratch']
  %s0 = inlined_call_operand.vmem [shape: s32[32,16], index: 0, kind: input, shape index: {}]
  %s1 = inlined_call_operand.hbm [shape: s32[32,16], index: 1, kind: output, shape index: {}]
  %s2 = sld [smem:[#allocation0]]
  $region37: #{branch_1_fun.3} parent=0
    _
  %s4 = ssub.s32 1, %s2
  %s5 = scalar_select 0, %s4, %s2
  $region1: #{branch_1_fun.3} parent=0
    #allocation2 [shape = 'u8[16384]{0}', space=vmem, size = 0x4000, scoped, tag = 'output window, operand 0']
    #allocation3 [shape = 's32[2]{0}', space=sflag, size = 0x8, scoped, tag = 'scoped memory for branch_1_fun.3']
    %6 = vsyncpa [#allocation3], 0
    %s7 = scalar_lea.sflag [#allocation3], 1
    %8 = vsyncpa %s7, 0
    loop: start=0, step=1, limit=4
    $region2: #{branch_1_fun.3} parent=1 // loop_pre_header
      _
    $region3: #{branch_1_fun.3} parent=1 // loop_header
      %s10 = sphi 0, %s14
      %p11 = scmp.ge.s32.totalorder %s10, 4
      %s20 = sphi 0, %s22
      %s23 = sphi 0, %s20
      %s24 = sphi 0, %s23
      %s40 = sphi 0, %s24
      %s46 = sphi 0, %s48
      %s49 = sphi 0, %s46
      %s50 = sphi 0, %s49
      %s66 = sphi 0, %s50
    $region4: #{branch_1_fun.3} parent=1 // loop_header_branch
      %13 = sbr.rel (%p11) target = $region8
    $region5: #{branch_1_fun.3} parent=1 // loop_body
      %s15 = ssub.s32 %s10, 1
      %s16 = ssub.s32 %s10, 2
      %s17 = sadd.s32 %s10, 1
      %s18 = ssub.s32 %s10, %s17
      %p19 = scmp.eq.s32.totalorder %s18, 0
      %s21 = sadd.s32 %s20, 1
      %s22 = scalar_select %p19, %s20, %s21
      %p25 = pneg %p19
      %p26 = scmp.eq.s32.totalorder %s10, 1
      %p27 = por %p25, %p26
      %p28 = scmp.ne.s32.totalorder %s20, %s23
      %p29 = scmp.eq.s32.totalorder %s10, 0
      %p30 = por %p28, %p29
      %p31 = scmp.ne.s32.totalorder %s20, %s23
      %p32 = scmp.eq.s32.totalorder %s15, 1
      %p33 = por %p31, %p32
      %p34 = scmp.ne.s32.totalorder %s23, %s24
      %p35 = scmp.eq.s32.totalorder %s15, 0
      %p36 = por %p34, %p35
      %p37 = scmp.ne.s32.totalorder %s23, %s24
      %p38 = scmp.eq.s32.totalorder %s16, 1
      %p39 = por %p37, %p38
      %p41 = scmp.ne.s32.totalorder %s24, %s40
      %p42 = scmp.eq.s32.totalorder %s16, 0
      %p43 = por %p41, %p42
      %s44 = ssub.s32 %s10, %s17
      %p45 = scmp.eq.s32.totalorder %s44, 0
      %s47 = sadd.s32 %s46, 1
      %s48 = scalar_select %p45, %s46, %s47
      %p51 = pneg %p45
      %p52 = scmp.eq.s32.totalorder %s10, 1
      %p53 = por %p51, %p52
      %p54 = scmp.ne.s32.totalorder %s46, %s49
      %p55 = scmp.eq.s32.totalorder %s10, 0
      %p56 = por %p54, %p55
      %p57 = scmp.ne.s32.totalorder %s46, %s49
      %p58 = scmp.eq.s32.totalorder %s15, 1
      %p59 = por %p57, %p58
      %p60 = scmp.ne.s32.totalorder %s49, %s50
      %p61 = scmp.eq.s32.totalorder %s15, 0
      %p62 = por %p60, %p61
      %p63 = scmp.ne.s32.totalorder %s49, %s50
      %p64 = scmp.eq.s32.totalorder %s16, 1
      %p65 = por %p63, %p64
      %p67 = scmp.ne.s32.totalorder %s50, %s66
      %p68 = scmp.eq.s32.totalorder %s16, 0
      %p69 = por %p67, %p68
      %p70 = scmp.le.s32.totalorder 1, %s10
      %p71 = scmp.lt.s32.totalorder %s10, 3
      %p72 = pnand %p70, %p71
      %p73 = pneg %p72
      // Predicated region
      $region9: #{branch_1_fun.3} parent=5 // pred_check
        _
      $region10: #{branch_1_fun.3} parent=5 // pred_check_branch
        %75 = sbr.rel (%p72) target = $region12
      $region11: #{branch_1_fun.3} parent=5 // pred_region
        %s76 = ssub.s32 %s10, 1
      $region12: #{branch_1_fun.3} parent=5 // pred_fallthru
        _
      %p77 = scmp.lt.s32.totalorder %s10, 2
      // Predicated region
      $region13: #{branch_1_fun.3} parent=5 // pred_check
        %p78 = pneg %p77
      $region14: #{branch_1_fun.3} parent=5 // pred_check_branch
        %80 = sbr.rel (%p78) target = $region16
      $region15: #{branch_1_fun.3} parent=5 // pred_region
        // Predicated region
        $region17: #{branch_1_fun.3} parent=15 // pred_check
          %p81 = pneg %p30
        $region18: #{branch_1_fun.3} parent=15 // pred_check_branch
          %83 = sbr.rel (%p81) target = $region20
        $region19: #{branch_1_fun.3} parent=15 // pred_region
          %s84 = smul.u32 2, %s10
          %p85 = scmp.lt.s32.totalorder %s84, 3
          %s86 = scalar_select %p85, %s84, 3
          %s87 = smul.addr %s86, 8
          %s88 = scalar_lea.vmem %s0, %s87
          %s89 = smul.u32 2, %s10
        $region20: #{branch_1_fun.3} parent=15 // pred_fallthru
          _
      $region16: #{branch_1_fun.3} parent=5 // pred_fallthru
        _
      %p90 = scmp.le.s32.totalorder 1, %s10
      %p91 = scmp.lt.s32.totalorder %s10, 3
      %p92 = pnand %p90, %p91
      %p93 = pneg %p92
      // Predicated region
      $region21: #{branch_1_fun.3} parent=5 // pred_check
        _
      $region22: #{branch_1_fun.3} parent=5 // pred_check_branch
        %95 = sbr.rel (%p92) target = $region24
      $region23: #{branch_1_fun.3} parent=5 // pred_region
        %s96 = ssub.s32 %s10, 1
        %s97 = smul.u32 2, %s15
        %p98 = scmp.lt.s32.totalorder %s97, 3
        %s99 = scalar_select %p98, %s97, 3
        %s100 = smul.addr %s99, 8
        %s101 = scalar_lea.vmem %s0, %s100
        %p102 = pneg %p36
        %p103 = pneg %p33
        %p104 = pneg %p62
        %p105 = pneg %p59
        %s106 = sand.u32 %s49, 1
        %s107 = scalar_lea.sflag [#allocation3], %s106
        %s108 = sand.u32 %s49, 1
        %s109 = smul.addr %s108, 16
        %s110 = scalar_lea.vmem [#allocation2], %s109
        %s111 = smul.u32 2, %s15
        %p112 = scmp.lt.s32.totalorder %s111, 3
        %s113 = scalar_select %p112, %s111, 3
        %s114 = smul.addr %s113, 8
        %s115 = scalar_lea.vmem %s0, %s114
        %s116 = smul.u32 2, %s15
        %s117 = smul.u32 2, %s15
        %v118 = vlaneseq
        %v119 = vshrl.u32 %v118, 7
        %v120 = vadd.s32 %v119, 8
        %v121 = vlaneseq
        %v122 = vand.u32 %v121, 127
        %v123 = vsub.s32 15, %v122
        %vm124 = vcmp.eq.s32.totalorder %v119, %v123
        %vm125 = vcmp.eq.s32.totalorder %v120, %v123
        %v126 = vsel %vm124, 1.0, 0.0
        %v127 = vsel %vm125, 1.0, 0.0
        %v128 = vld [vmem:[%s115] sm:$0xff]
        %v129 = vld [vmem:[%s115 + $0x8] sm:$0xff]
        %v130 = vcvt.s32.f32 %v128
        %v131 = vcvt.s32.f32 %v129
        %vm132 = vcmask 130048
        %v134 = vsel %vm132, %v130, 0
        %v137 = vsel %vm132, %v131, 0
        %139 = vmatpush.msra.mxu0 0.0
        %140 = vmatpush.msra.mxu0 0.0
        %141 = vmatpush.msra.mxu0 0.0
        %142 = vmatpush.msra.mxu0 0.0
        %143 = vmatpush.msra.mxu0 0.0
        %144 = vmatpush.msra.mxu0 0.0
        %145 = vmatpush.msra.mxu0 0.0
        %146 = vmatpush.msra.mxu0 0.0
        %147 = vmatpush.msra.mxu0 0.0
        %148 = vmatpush.msra.mxu0 0.0
        %149 = vmatpush.msra.mxu0 0.0
        %150 = vmatpush.msra.mxu0 0.0
        %151 = vmatpush.msra.mxu0 0.0
        %152 = vmatpush.msra.mxu0 0.0
        %153 = vmatpush.msra.mxu0 %v127
        %154 = vmatpush.msra.mxu0 %v126
        %v155 = vand.u32 %v134, 4294901760
        %v156 = vsub.f32 %v134, %v155
        %v157 = vand.u32 %v156, 4294901760
        %v158 = vsub.f32 %v156, %v157
        %v159 = vand.u32 %v158, 4294901760
        %160 = vmatmul.f32.gmra.mxu0 %v159
        %v161 = vpop.f32.mrf.mxu0
        %v162 = vadd.f32 0.0, %v161
        %v163 = vand.u32 %v137, 4294901760
        %v164 = vsub.f32 %v137, %v163
        %v165 = vand.u32 %v164, 4294901760
        %v166 = vsub.f32 %v164, %v165
        %v167 = vand.u32 %v166, 4294901760
        %168 = vmatmul.f32.gmra.mxu0 %v167
        %v169 = vpop.f32.mrf.mxu0
        %v170 = vadd.f32 0.0, %v169
        %171 = vdwg.mxu0
        %172 = vmatpush.msra.mxu0 0.0
        %173 = vmatpush.msra.mxu0 0.0
        %174 = vmatpush.msra.mxu0 0.0
        %175 = vmatpush.msra.mxu0 0.0
        %176 = vmatpush.msra.mxu0 0.0
        %177 = vmatpush.msra.mxu0 0.0
        %178 = vmatpush.msra.mxu0 0.0
        %179 = vmatpush.msra.mxu0 0.0
        %180 = vmatpush.msra.mxu0 0.0
        %181 = vmatpush.msra.mxu0 0.0
        %182 = vmatpush.msra.mxu0 0.0
        %183 = vmatpush.msra.mxu0 0.0
        %184 = vmatpush.msra.mxu0 0.0
        %185 = vmatpush.msra.mxu0 0.0
        %v186 = vsub.f32 %v127, %v127
        %v187 = vand.u32 %v186, 4294901760
        %v188 = vsub.f32 %v186, %v187
        %v189 = vand.u32 %v188, 4294901760
        %190 = vmatpush.msra.mxu0 %v189
        %v191 = vsub.f32 %v126, %v126
        %v192 = vand.u32 %v191, 4294901760
        %v193 = vsub.f32 %v191, %v192
        %v194 = vand.u32 %v193, 4294901760
        %195 = vmatpush.msra.mxu0 %v194
        %v196 = vand.u32 %v134, 4294901760
        %197 = vmatmul.f32.gmra.mxu0 %v196
        %v198 = vpop.f32.mrf.mxu0
        %v199 = vadd.f32 %v162, %v198
        %v200 = vand.u32 %v137, 4294901760
        %201 = vmatmul.f32.gmra.mxu0 %v200
        %v202 = vpop.f32.mrf.mxu0
        %v203 = vadd.f32 %v170, %v202
        %204 = vdwg.mxu0
        %205 = vmatpush.msra.mxu0 0.0
        %206 = vmatpush.msra.mxu0 0.0
        %207 = vmatpush.msra.mxu0 0.0
        %208 = vmatpush.msra.mxu0 0.0
        %209 = vmatpush.msra.mxu0 0.0
        %210 = vmatpush.msra.mxu0 0.0
        %211 = vmatpush.msra.mxu0 0.0
        %212 = vmatpush.msra.mxu0 0.0
        %213 = vmatpush.msra.mxu0 0.0
        %214 = vmatpush.msra.mxu0 0.0
        %215 = vmatpush.msra.mxu0 0.0
        %216 = vmatpush.msra.mxu0 0.0
        %217 = vmatpush.msra.mxu0 0.0
        %218 = vmatpush.msra.mxu0 0.0
        %v219 = vsub.f32 %v127, %v127
        %220 = vmatpush.msra.mxu0 %v219
        %v221 = vsub.f32 %v126, %v126
        %222 = vmatpush.msra.mxu0 %v221
        %v223 = vand.u32 %v134, 4294901760
        %v224 = vsub.f32 %v134, %v223
        %225 = vmatmul.f32.gmra.mxu0 %v224
        %v226 = vpop.f32.mrf.mxu0
        %v227 = vadd.f32 %v199, %v226
        %v228 = vand.u32 %v137, 4294901760
        %v229 = vsub.f32 %v137, %v228
        %230 = vmatmul.f32.gmra.mxu0 %v229
        %v231 = vpop.f32.mrf.mxu0
        %v232 = vadd.f32 %v203, %v231
        %233 = vdwg.mxu0
        %234 = vmatpush.msra.mxu0 0.0
        %235 = vmatpush.msra.mxu0 0.0
        %236 = vmatpush.msra.mxu0 0.0
        %237 = vmatpush.msra.mxu0 0.0
        %238 = vmatpush.msra.mxu0 0.0
        %239 = vmatpush.msra.mxu0 0.0
        %240 = vmatpush.msra.mxu0 0.0
        %241 = vmatpush.msra.mxu0 0.0
        %242 = vmatpush.msra.mxu0 0.0
        %243 = vmatpush.msra.mxu0 0.0
        %244 = vmatpush.msra.mxu0 0.0
        %245 = vmatpush.msra.mxu0 0.0
        %246 = vmatpush.msra.mxu0 0.0
        %247 = vmatpush.msra.mxu0 0.0
        %248 = vmatpush.msra.mxu0 %v127
        %249 = vmatpush.msra.mxu0 %v126
        %v250 = vand.u32 %v134, 4294901760
        %v251 = vsub.f32 %v134, %v250
        %v252 = vand.u32 %v251, 4294901760
        %253 = vmatmul.f32.gmra.mxu0 %v252
        %v254 = vpop.f32.mrf.mxu0
        %v255 = vadd.f32 %v227, %v254
        %v256 = vand.u32 %v137, 4294901760
        %v257 = vsub.f32 %v137, %v256
        %v258 = vand.u32 %v257, 4294901760
        %259 = vmatmul.f32.gmra.mxu0 %v258
        %v260 = vpop.f32.mrf.mxu0
        %v261 = vadd.f32 %v232, %v260
        %262 = vdwg.mxu0
        %263 = vmatpush.msra.mxu0 0.0
        %264 = vmatpush.msra.mxu0 0.0
        %265 = vmatpush.msra.mxu0 0.0
        %266 = vmatpush.msra.mxu0 0.0
        %267 = vmatpush.msra.mxu0 0.0
        %268 = vmatpush.msra.mxu0 0.0
        %269 = vmatpush.msra.mxu0 0.0
        %270 = vmatpush.msra.mxu0 0.0
        %271 = vmatpush.msra.mxu0 0.0
        %272 = vmatpush.msra.mxu0 0.0
        %273 = vmatpush.msra.mxu0 0.0
        %274 = vmatpush.msra.mxu0 0.0
        %275 = vmatpush.msra.mxu0 0.0
        %276 = vmatpush.msra.mxu0 0.0
        %v277 = vsub.f32 %v127, %v127
        %v278 = vand.u32 %v277, 4294901760
        %279 = vmatpush.msra.mxu0 %v278
        %v280 = vsub.f32 %v126, %v126
        %v281 = vand.u32 %v280, 4294901760
        %282 = vmatpush.msra.mxu0 %v281
        %v283 = vand.u32 %v134, 4294901760
        %284 = vmatmul.f32.gmra.mxu0 %v283
        %v285 = vpop.f32.mrf.mxu0
        %v286 = vadd.f32 %v255, %v285
        %v287 = vand.u32 %v137, 4294901760
        %288 = vmatmul.f32.gmra.mxu0 %v287
        %v289 = vpop.f32.mrf.mxu0
        %v290 = vadd.f32 %v261, %v289
        %291 = vdwg.mxu0
        %292 = vmatpush.msra.mxu0 0.0
        %293 = vmatpush.msra.mxu0 0.0
        %294 = vmatpush.msra.mxu0 0.0
        %295 = vmatpush.msra.mxu0 0.0
        %296 = vmatpush.msra.mxu0 0.0
        %297 = vmatpush.msra.mxu0 0.0
        %298 = vmatpush.msra.mxu0 0.0
        %299 = vmatpush.msra.mxu0 0.0
        %300 = vmatpush.msra.mxu0 0.0
        %301 = vmatpush.msra.mxu0 0.0
        %302 = vmatpush.msra.mxu0 0.0
        %303 = vmatpush.msra.mxu0 0.0
        %304 = vmatpush.msra.mxu0 0.0
        %305 = vmatpush.msra.mxu0 0.0
        %306 = vmatpush.msra.mxu0 %v127
        %307 = vmatpush.msra.mxu0 %v126
        %v308 = vand.u32 %v134, 4294901760
        %309 = vmatmul.f32.gmra.mxu0 %v308
        %v310 = vpop.f32.mrf.mxu0
        %v311 = vadd.f32 %v286, %v310
        %v312 = vand.u32 %v137, 4294901760
        %313 = vmatmul.f32.gmra.mxu0 %v312
        %v314 = vpop.f32.mrf.mxu0
        %v315 = vadd.f32 %v290, %v314
        %316 = vdwg.mxu0
        %v317 = vcvt.f32.s32.ties.to.even %v311
        %v318 = vcvt.f32.s32.ties.to.even %v315
        %319 = vst.msk [vmem:[%s110] sm:$0xff] %vm132, %v317
        %320 = vst.msk [vmem:[%s110 + $0x8] sm:$0xff] %vm132, %v318
        %s321 = sand.u32 %s49, 1
        %s322 = scalar_lea.sflag [#allocation3], %s321
        %s323 = sand.u32 %s49, 1
        %s324 = smul.addr %s323, 16
        %s325 = scalar_lea.vmem [#allocation2], %s324
        // Predicated region
        $region25: #{branch_1_fun.3} parent=23 // pred_check
          %p326 = pneg %p59
        $region26: #{branch_1_fun.3} parent=23 // pred_check_branch
          %328 = sbr.rel (%p326) target = $region28
        $region27: #{branch_1_fun.3} parent=23 // pred_region
          %s329 = smul.u32 2, %s15
          %331 = vsyncadd %s322, 0
          %s332 = smul.addr %s329, 8
          %s333 = scalar_lea.hbm %s1, %s332
          %s334 = sshll.u32 %s325, 4
          %s335 = int_to_ptr.vmem [resolvable:$true] %s334
          %s336 = sshll.u32 %s333, 4
          %s337 = int_to_ptr.hbm [resolvable:$true] %s336
          %342 = dma.vmem_to_hbm [thread:$0]  %s335, 256, %s337, %s322, 128, 128, 8
        $region28: #{branch_1_fun.3} parent=23 // pred_fallthru
          _
      $region24: #{branch_1_fun.3} parent=5 // pred_fallthru
        _
      %p343 = scmp.le.s32.totalorder 2, %s10
      // Predicated region
      $region29: #{branch_1_fun.3} parent=5 // pred_check
        %p344 = pneg %p343
      $region30: #{branch_1_fun.3} parent=5 // pred_check_branch
        %346 = sbr.rel (%p344) target = $region32
      $region31: #{branch_1_fun.3} parent=5 // pred_region
        %s347 = ssub.s32 %s10, 2
        // Predicated region
        $region33: #{branch_1_fun.3} parent=31 // pred_check
          %p348 = pneg %p65
        $region34: #{branch_1_fun.3} parent=31 // pred_check_branch
          %350 = sbr.rel (%p348) target = $region36
        $region35: #{branch_1_fun.3} parent=31 // pred_region
          %s351 = sand.u32 %s50, 1
          %s352 = scalar_lea.sflag [#allocation3], %s351
          %s353 = sand.u32 %s50, 1
          %s354 = smul.addr %s353, 16
          %s355 = scalar_lea.vmem [#allocation2], %s354
          %357 = dma.done %s352, 256
        $region36: #{branch_1_fun.3} parent=31 // pred_fallthru
          _
      $region32: #{branch_1_fun.3} parent=5 // pred_fallthru
        _
    $region6: #{branch_1_fun.3} parent=1 // loop_footer
      %s14 = sadd.s32 1, %s10
    $region7: #{branch_1_fun.3} parent=1 // loop_footer_branch
      %9 = sbr.rel target = $region3
    $region8: #{branch_1_fun.3} parent=1 // loop_exit
      _
    %358 = vsyncpa [#allocation3], 1
    %s359 = scalar_lea.sflag [#allocation3], 1
    %360 = vsyncpa %s359, 1

// kernel: branch_1_fun.2
$region0: #{branch_1_fun.2}
  #allocation0 [shape = 'u32[]', space=smem, size = 0x4, offset = 0x4, fixed_abs, tag = 'smem constant byte address 0x4 - core index']
  #allocation1 [shape = 'u32[72,128]{1,0:T(1,128)}', space=vmem, size = 0x9000, scoped, tag = 'internal scratch']
  %s0 = inlined_call_operand.vmem [shape: f32[128,16], index: 0, kind: input, shape index: {}]
  %s1 = inlined_call_operand.hbm [shape: f32[128,16], index: 1, kind: output, shape index: {}]
  %s2 = sld [smem:[#allocation0]]
  $region37: #{branch_1_fun.2} parent=0
    _
  %s4 = ssub.s32 1, %s2
  %s5 = scalar_select 0, %s4, %s2
  $region1: #{branch_1_fun.2} parent=0
    #allocation2 [shape = 'u8[65536]{0}', space=vmem, size = 0x10000, scoped, tag = 'output window, operand 0']
    #allocation3 [shape = 's32[2]{0}', space=sflag, size = 0x8, scoped, tag = 'scoped memory for branch_1_fun.2']
    %6 = vsyncpa [#allocation3], 0
    %s7 = scalar_lea.sflag [#allocation3], 1
    %8 = vsyncpa %s7, 0
    loop: start=0, step=1, limit=4
    $region2: #{branch_1_fun.2} parent=1 // loop_pre_header
      _
    $region3: #{branch_1_fun.2} parent=1 // loop_header
      %s10 = sphi 0, %s14
      %p11 = scmp.ge.s32.totalorder %s10, 4
      %s20 = sphi 0, %s22
      %s23 = sphi 0, %s20
      %s24 = sphi 0, %s23
      %s40 = sphi 0, %s24
      %s46 = sphi 0, %s48
      %s49 = sphi 0, %s46
      %s50 = sphi 0, %s49
      %s66 = sphi 0, %s50
    $region4: #{branch_1_fun.2} parent=1 // loop_header_branch
      %13 = sbr.rel (%p11) target = $region8
    $region5: #{branch_1_fun.2} parent=1 // loop_body
      %s15 = ssub.s32 %s10, 1
      %s16 = ssub.s32 %s10, 2
      %s17 = sadd.s32 %s10, 1
      %s18 = ssub.s32 %s10, %s17
      %p19 = scmp.eq.s32.totalorder %s18, 0
      %s21 = sadd.s32 %s20, 1
      %s22 = scalar_select %p19, %s20, %s21
      %p25 = pneg %p19
      %p26 = scmp.eq.s32.totalorder %s10, 1
      %p27 = por %p25, %p26
      %p28 = scmp.ne.s32.totalorder %s20, %s23
      %p29 = scmp.eq.s32.totalorder %s10, 0
      %p30 = por %p28, %p29
      %p31 = scmp.ne.s32.totalorder %s20, %s23
      %p32 = scmp.eq.s32.totalorder %s15, 1
      %p33 = por %p31, %p32
      %p34 = scmp.ne.s32.totalorder %s23, %s24
      %p35 = scmp.eq.s32.totalorder %s15, 0
      %p36 = por %p34, %p35
      %p37 = scmp.ne.s32.totalorder %s23, %s24
      %p38 = scmp.eq.s32.totalorder %s16, 1
      %p39 = por %p37, %p38
      %p41 = scmp.ne.s32.totalorder %s24, %s40
      %p42 = scmp.eq.s32.totalorder %s16, 0
      %p43 = por %p41, %p42
      %s44 = ssub.s32 %s10, %s17
      %p45 = scmp.eq.s32.totalorder %s44, 0
      %s47 = sadd.s32 %s46, 1
      %s48 = scalar_select %p45, %s46, %s47
      %p51 = pneg %p45
      %p52 = scmp.eq.s32.totalorder %s10, 1
      %p53 = por %p51, %p52
      %p54 = scmp.ne.s32.totalorder %s46, %s49
      %p55 = scmp.eq.s32.totalorder %s10, 0
      %p56 = por %p54, %p55
      %p57 = scmp.ne.s32.totalorder %s46, %s49
      %p58 = scmp.eq.s32.totalorder %s15, 1
      %p59 = por %p57, %p58
      %p60 = scmp.ne.s32.totalorder %s49, %s50
      %p61 = scmp.eq.s32.totalorder %s15, 0
      %p62 = por %p60, %p61
      %p63 = scmp.ne.s32.totalorder %s49, %s50
      %p64 = scmp.eq.s32.totalorder %s16, 1
      %p65 = por %p63, %p64
      %p67 = scmp.ne.s32.totalorder %s50, %s66
      %p68 = scmp.eq.s32.totalorder %s16, 0
      %p69 = por %p67, %p68
      %p70 = scmp.le.s32.totalorder 1, %s10
      %p71 = scmp.lt.s32.totalorder %s10, 3
      %p72 = pnand %p70, %p71
      %p73 = pneg %p72
      // Predicated region
      $region9: #{branch_1_fun.2} parent=5 // pred_check
        _
      $region10: #{branch_1_fun.2} parent=5 // pred_check_branch
        %75 = sbr.rel (%p72) target = $region12
      $region11: #{branch_1_fun.2} parent=5 // pred_region
        %s76 = ssub.s32 %s10, 1
      $region12: #{branch_1_fun.2} parent=5 // pred_fallthru
        _
      %p77 = scmp.lt.s32.totalorder %s10, 2
      // Predicated region
      $region13: #{branch_1_fun.2} parent=5 // pred_check
        %p78 = pneg %p77
      $region14: #{branch_1_fun.2} parent=5 // pred_check_branch
        %80 = sbr.rel (%p78) target = $region16
      $region15: #{branch_1_fun.2} parent=5 // pred_region
        // Predicated region
        $region17: #{branch_1_fun.2} parent=15 // pred_check
          %p81 = pneg %p30
        $region18: #{branch_1_fun.2} parent=15 // pred_check_branch
          %83 = sbr.rel (%p81) target = $region20
        $region19: #{branch_1_fun.2} parent=15 // pred_region
          %s84 = smul.u32 8, %s10
          %p85 = scmp.lt.s32.totalorder %s84, 15
          %s86 = scalar_select %p85, %s84, 15
          %s87 = smul.addr %s86, 8
          %s88 = scalar_lea.vmem %s0, %s87
          %s89 = smul.u32 8, %s10
        $region20: #{branch_1_fun.2} parent=15 // pred_fallthru
          _
      $region16: #{branch_1_fun.2} parent=5 // pred_fallthru
        _
      %p90 = scmp.le.s32.totalorder 1, %s10
      %p91 = scmp.lt.s32.totalorder %s10, 3
      %p92 = pnand %p90, %p91
      %p93 = pneg %p92
      // Predicated region
      $region21: #{branch_1_fun.2} parent=5 // pred_check
        _
      $region22: #{branch_1_fun.2} parent=5 // pred_check_branch
        %95 = sbr.rel (%p92) target = $region24
      $region23: #{branch_1_fun.2} parent=5 // pred_region
        %s96 = ssub.s32 %s10, 1
        %s97 = smul.u32 8, %s15
        %p98 = scmp.lt.s32.totalorder %s97, 15
        %s99 = scalar_select %p98, %s97, 15
        %s100 = smul.addr %s99, 8
        %s101 = scalar_lea.vmem %s0, %s100
        %p102 = pneg %p36
        %p103 = pneg %p33
        %p104 = pneg %p62
        %p105 = pneg %p59
        %s106 = sand.u32 %s49, 1
        %s107 = scalar_lea.sflag [#allocation3], %s106
        %s108 = sand.u32 %s49, 1
        %s109 = smul.addr %s108, 64
        %s110 = scalar_lea.vmem [#allocation2], %s109
        %s111 = smul.u32 8, %s15
        %p112 = scmp.lt.s32.totalorder %s111, 15
        %s113 = scalar_select %p112, %s111, 15
        %s114 = smul.addr %s113, 8
        %s115 = scalar_lea.vmem %s0, %s114
        %s116 = smul.u32 8, %s15
        %s117 = smul.u32 8, %s15
        %v118 = vlaneseq
        %v119 = vshrl.u32 %v118, 7
        %v120 = vadd.s32 %v119, 8
        %v121 = vlaneseq
        %v122 = vand.u32 %v121, 127
        %v123 = vsub.s32 15, %v122
        %vm124 = vcmp.eq.s32.totalorder %v119, %v123
        %vm125 = vcmp.eq.s32.totalorder %v120, %v123
        %v126 = vsel %vm124, 1.0, 0.0
        %v127 = vsel %vm125, 1.0, 0.0
        %v128 = vld [vmem:[%s115] sm:$0xff]
        %v129 = vld [vmem:[%s115 + $0x8] sm:$0xff]
        %v130 = vld [vmem:[%s115 + $0x10] sm:$0xff]
        %v131 = vld [vmem:[%s115 + $0x18] sm:$0xff]
        %v132 = vld [vmem:[%s115 + $0x20] sm:$0xff]
        %v133 = vld [vmem:[%s115 + $0x28] sm:$0xff]
        %v134 = vld [vmem:[%s115 + $0x30] sm:$0xff]
        %v135 = vld [vmem:[%s115 + $0x38] sm:$0xff]
        %vm136 = vcmask 130048
        %v138 = vsel %vm136, %v128, 0
        %v141 = vsel %vm136, %v129, 0
        %v144 = vsel %vm136, %v130, 0
        %v147 = vsel %vm136, %v131, 0
        %v150 = vsel %vm136, %v132, 0
        %v153 = vsel %vm136, %v133, 0
        %v156 = vsel %vm136, %v134, 0
        %v159 = vsel %vm136, %v135, 0
        %161 = vmatpush.msra.mxu0 0.0
        %162 = vmatpush.msra.mxu0 0.0
        %163 = vmatpush.msra.mxu0 0.0
        %164 = vmatpush.msra.mxu0 0.0
        %165 = vmatpush.msra.mxu0 0.0
        %166 = vmatpush.msra.mxu0 0.0
        %167 = vmatpush.msra.mxu0 0.0
        %168 = vmatpush.msra.mxu0 0.0
        %169 = vmatpush.msra.mxu0 0.0
        %170 = vmatpush.msra.mxu0 0.0
        %171 = vmatpush.msra.mxu0 0.0
        %172 = vmatpush.msra.mxu0 0.0
        %173 = vmatpush.msra.mxu0 0.0
        %174 = vmatpush.msra.mxu0 0.0
        %175 = vmatpush.msra.mxu0 %v127
        %176 = vmatpush.msra.mxu0 %v126
        %v177 = vand.u32 %v138, 4294901760
        %v178 = vsub.f32 %v138, %v177
        %v179 = vand.u32 %v178, 4294901760
        %v180 = vsub.f32 %v178, %v179
        %v181 = vand.u32 %v180, 4294901760
        %182 = vmatmul.f32.gmra.mxu0 %v181
        %v183 = vpop.f32.mrf.mxu0
        %v184 = vadd.f32 0.0, %v183
        %v185 = vand.u32 %v141, 4294901760
        %v186 = vsub.f32 %v141, %v185
        %v187 = vand.u32 %v186, 4294901760
        %v188 = vsub.f32 %v186, %v187
        %v189 = vand.u32 %v188, 4294901760
        %190 = vmatmul.f32.gmra.mxu0 %v189
        %v191 = vpop.f32.mrf.mxu0
        %v192 = vadd.f32 0.0, %v191
        %v193 = vand.u32 %v144, 4294901760
        %v194 = vsub.f32 %v144, %v193
        %v195 = vand.u32 %v194, 4294901760
        %v196 = vsub.f32 %v194, %v195
        %v197 = vand.u32 %v196, 4294901760
        %198 = vmatmul.f32.gmra.mxu0 %v197
        %v199 = vpop.f32.mrf.mxu0
        %v200 = vadd.f32 0.0, %v199
        %v201 = vand.u32 %v147, 4294901760
        %v202 = vsub.f32 %v147, %v201
        %v203 = vand.u32 %v202, 4294901760
        %v204 = vsub.f32 %v202, %v203
        %v205 = vand.u32 %v204, 4294901760
        %206 = vmatmul.f32.gmra.mxu0 %v205
        %v207 = vpop.f32.mrf.mxu0
        %v208 = vadd.f32 0.0, %v207
        %v209 = vand.u32 %v150, 4294901760
        %v210 = vsub.f32 %v150, %v209
        %v211 = vand.u32 %v210, 4294901760
        %v212 = vsub.f32 %v210, %v211
        %v213 = vand.u32 %v212, 4294901760
        %214 = vmatmul.f32.gmra.mxu0 %v213
        %v215 = vpop.f32.mrf.mxu0
        %v216 = vadd.f32 0.0, %v215
        %v217 = vand.u32 %v153, 4294901760
        %v218 = vsub.f32 %v153, %v217
        %v219 = vand.u32 %v218, 4294901760
        %v220 = vsub.f32 %v218, %v219
        %v221 = vand.u32 %v220, 4294901760
        %222 = vmatmul.f32.gmra.mxu0 %v221
        %v223 = vpop.f32.mrf.mxu0
        %v224 = vadd.f32 0.0, %v223
        %v225 = vand.u32 %v156, 4294901760
        %v226 = vsub.f32 %v156, %v225
        %v227 = vand.u32 %v226, 4294901760
        %v228 = vsub.f32 %v226, %v227
        %v229 = vand.u32 %v228, 4294901760
        %230 = vmatmul.f32.gmra.mxu0 %v229
        %v231 = vpop.f32.mrf.mxu0
        %v232 = vadd.f32 0.0, %v231
        %v233 = vand.u32 %v159, 4294901760
        %v234 = vsub.f32 %v159, %v233
        %v235 = vand.u32 %v234, 4294901760
        %v236 = vsub.f32 %v234, %v235
        %v237 = vand.u32 %v236, 4294901760
        %238 = vmatmul.f32.gmra.mxu0 %v237
        %v239 = vpop.f32.mrf.mxu0
        %v240 = vadd.f32 0.0, %v239
        %241 = vdwg.mxu0
        %242 = vmatpush.msra.mxu0 0.0
        %243 = vmatpush.msra.mxu0 0.0
        %244 = vmatpush.msra.mxu0 0.0
        %245 = vmatpush.msra.mxu0 0.0
        %246 = vmatpush.msra.mxu0 0.0
        %247 = vmatpush.msra.mxu0 0.0
        %248 = vmatpush.msra.mxu0 0.0
        %249 = vmatpush.msra.mxu0 0.0
        %250 = vmatpush.msra.mxu0 0.0
        %251 = vmatpush.msra.mxu0 0.0
        %252 = vmatpush.msra.mxu0 0.0
        %253 = vmatpush.msra.mxu0 0.0
        %254 = vmatpush.msra.mxu0 0.0
        %255 = vmatpush.msra.mxu0 0.0
        %v256 = vsub.f32 %v127, %v127
        %v257 = vand.u32 %v256, 4294901760
        %v258 = vsub.f32 %v256, %v257
        %v259 = vand.u32 %v258, 4294901760
        %260 = vmatpush.msra.mxu0 %v259
        %v261 = vsub.f32 %v126, %v126
        %v262 = vand.u32 %v261, 4294901760
        %v263 = vsub.f32 %v261, %v262
        %v264 = vand.u32 %v263, 4294901760
        %265 = vmatpush.msra.mxu0 %v264
        %v266 = vand.u32 %v138, 4294901760
        %267 = vmatmul.f32.gmra.mxu0 %v266
        %v268 = vpop.f32.mrf.mxu0
        %v269 = vadd.f32 %v184, %v268
        %v270 = vand.u32 %v141, 4294901760
        %271 = vmatmul.f32.gmra.mxu0 %v270
        %v272 = vpop.f32.mrf.mxu0
        %v273 = vadd.f32 %v192, %v272
        %v274 = vand.u32 %v144, 4294901760
        %275 = vmatmul.f32.gmra.mxu0 %v274
        %v276 = vpop.f32.mrf.mxu0
        %v277 = vadd.f32 %v200, %v276
        %v278 = vand.u32 %v147, 4294901760
        %279 = vmatmul.f32.gmra.mxu0 %v278
        %v280 = vpop.f32.mrf.mxu0
        %v281 = vadd.f32 %v208, %v280
        %v282 = vand.u32 %v150, 4294901760
        %283 = vmatmul.f32.gmra.mxu0 %v282
        %v284 = vpop.f32.mrf.mxu0
        %v285 = vadd.f32 %v216, %v284
        %v286 = vand.u32 %v153, 4294901760
        %287 = vmatmul.f32.gmra.mxu0 %v286
        %v288 = vpop.f32.mrf.mxu0
        %v289 = vadd.f32 %v224, %v288
        %v290 = vand.u32 %v156, 4294901760
        %291 = vmatmul.f32.gmra.mxu0 %v290
        %v292 = vpop.f32.mrf.mxu0
        %v293 = vadd.f32 %v232, %v292
        %v294 = vand.u32 %v159, 4294901760
        %295 = vmatmul.f32.gmra.mxu0 %v294
        %v296 = vpop.f32.mrf.mxu0
        %v297 = vadd.f32 %v240, %v296
        %298 = vdwg.mxu0
        %299 = vmatpush.msra.mxu0 0.0
        %300 = vmatpush.msra.mxu0 0.0
        %301 = vmatpush.msra.mxu0 0.0
        %302 = vmatpush.msra.mxu0 0.0
        %303 = vmatpush.msra.mxu0 0.0
        %304 = vmatpush.msra.mxu0 0.0
        %305 = vmatpush.msra.mxu0 0.0
        %306 = vmatpush.msra.mxu0 0.0
        %307 = vmatpush.msra.mxu0 0.0
        %308 = vmatpush.msra.mxu0 0.0
        %309 = vmatpush.msra.mxu0 0.0
        %310 = vmatpush.msra.mxu0 0.0
        %311 = vmatpush.msra.mxu0 0.0
        %312 = vmatpush.msra.mxu0 0.0
        %v313 = vsub.f32 %v127, %v127
        %314 = vmatpush.msra.mxu0 %v313
        %v315 = vsub.f32 %v126, %v126
        %316 = vmatpush.msra.mxu0 %v315
        %v317 = vand.u32 %v138, 4294901760
        %v318 = vsub.f32 %v138, %v317
        %319 = vmatmul.f32.gmra.mxu0 %v318
        %v320 = vpop.f32.mrf.mxu0
        %v321 = vadd.f32 %v269, %v320
        %v322 = vand.u32 %v141, 4294901760
        %v323 = vsub.f32 %v141, %v322
        %324 = vmatmul.f32.gmra.mxu0 %v323
        %v325 = vpop.f32.mrf.mxu0
        %v326 = vadd.f32 %v273, %v325
        %v327 = vand.u32 %v144, 4294901760
        %v328 = vsub.f32 %v144, %v327
        %329 = vmatmul.f32.gmra.mxu0 %v328
        %v330 = vpop.f32.mrf.mxu0
        %v331 = vadd.f32 %v277, %v330
        %v332 = vand.u32 %v147, 4294901760
        %v333 = vsub.f32 %v147, %v332
        %334 = vmatmul.f32.gmra.mxu0 %v333
        %v335 = vpop.f32.mrf.mxu0
        %v336 = vadd.f32 %v281, %v335
        %v337 = vand.u32 %v150, 4294901760
        %v338 = vsub.f32 %v150, %v337
        %339 = vmatmul.f32.gmra.mxu0 %v338
        %v340 = vpop.f32.mrf.mxu0
        %v341 = vadd.f32 %v285, %v340
        %v342 = vand.u32 %v153, 4294901760
        %v343 = vsub.f32 %v153, %v342
        %344 = vmatmul.f32.gmra.mxu0 %v343
        %v345 = vpop.f32.mrf.mxu0
        %v346 = vadd.f32 %v289, %v345
        %v347 = vand.u32 %v156, 4294901760
        %v348 = vsub.f32 %v156, %v347
        %349 = vmatmul.f32.gmra.mxu0 %v348
        %v350 = vpop.f32.mrf.mxu0
        %v351 = vadd.f32 %v293, %v350
        %v352 = vand.u32 %v159, 4294901760
        %v353 = vsub.f32 %v159, %v352
        %354 = vmatmul.f32.gmra.mxu0 %v353
        %v355 = vpop.f32.mrf.mxu0
        %v356 = vadd.f32 %v297, %v355
        %357 = vdwg.mxu0
        %358 = vmatpush.msra.mxu0 0.0
        %359 = vmatpush.msra.mxu0 0.0
        %360 = vmatpush.msra.mxu0 0.0
        %361 = vmatpush.msra.mxu0 0.0
        %362 = vmatpush.msra.mxu0 0.0
        %363 = vmatpush.msra.mxu0 0.0
        %364 = vmatpush.msra.mxu0 0.0
        %365 = vmatpush.msra.mxu0 0.0
        %366 = vmatpush.msra.mxu0 0.0
        %367 = vmatpush.msra.mxu0 0.0
        %368 = vmatpush.msra.mxu0 0.0
        %369 = vmatpush.msra.mxu0 0.0
        %370 = vmatpush.msra.mxu0 0.0
        %371 = vmatpush.msra.mxu0 0.0
        %372 = vmatpush.msra.mxu0 %v127
        %373 = vmatpush.msra.mxu0 %v126
        %v374 = vand.u32 %v138, 4294901760
        %v375 = vsub.f32 %v138, %v374
        %v376 = vand.u32 %v375, 4294901760
        %377 = vmatmul.f32.gmra.mxu0 %v376
        %v378 = vpop.f32.mrf.mxu0
        %v379 = vadd.f32 %v321, %v378
        %v380 = vand.u32 %v141, 4294901760
        %v381 = vsub.f32 %v141, %v380
        %v382 = vand.u32 %v381, 4294901760
        %383 = vmatmul.f32.gmra.mxu0 %v382
        %v384 = vpop.f32.mrf.mxu0
        %v385 = vadd.f32 %v326, %v384
        %v386 = vand.u32 %v144, 4294901760
        %v387 = vsub.f32 %v144, %v386
        %v388 = vand.u32 %v387, 4294901760
        %389 = vmatmul.f32.gmra.mxu0 %v388
        %v390 = vpop.f32.mrf.mxu0
        %v391 = vadd.f32 %v331, %v390
        %v392 = vand.u32 %v147, 4294901760
        %v393 = vsub.f32 %v147, %v392
        %v394 = vand.u32 %v393, 4294901760
        %395 = vmatmul.f32.gmra.mxu0 %v394
        %v396 = vpop.f32.mrf.mxu0
        %v397 = vadd.f32 %v336, %v396
        %v398 = vand.u32 %v150, 4294901760
        %v399 = vsub.f32 %v150, %v398
        %v400 = vand.u32 %v399, 4294901760
        %401 = vmatmul.f32.gmra.mxu0 %v400
        %v402 = vpop.f32.mrf.mxu0
        %v403 = vadd.f32 %v341, %v402
        %v404 = vand.u32 %v153, 4294901760
        %v405 = vsub.f32 %v153, %v404
        %v406 = vand.u32 %v405, 4294901760
        %407 = vmatmul.f32.gmra.mxu0 %v406
        %v408 = vpop.f32.mrf.mxu0
        %v409 = vadd.f32 %v346, %v408
        %v410 = vand.u32 %v156, 4294901760
        %v411 = vsub.f32 %v156, %v410
        %v412 = vand.u32 %v411, 4294901760
        %413 = vmatmul.f32.gmra.mxu0 %v412
        %v414 = vpop.f32.mrf.mxu0
        %v415 = vadd.f32 %v351, %v414
        %v416 = vand.u32 %v159, 4294901760
        %v417 = vsub.f32 %v159, %v416
        %v418 = vand.u32 %v417, 4294901760
        %419 = vmatmul.f32.gmra.mxu0 %v418
        %v420 = vpop.f32.mrf.mxu0
        %v421 = vadd.f32 %v356, %v420
        %422 = vdwg.mxu0
        %423 = vmatpush.msra.mxu0 0.0
        %424 = vmatpush.msra.mxu0 0.0
        %425 = vmatpush.msra.mxu0 0.0
        %426 = vmatpush.msra.mxu0 0.0
        %427 = vmatpush.msra.mxu0 0.0
        %428 = vmatpush.msra.mxu0 0.0
        %429 = vmatpush.msra.mxu0 0.0
        %430 = vmatpush.msra.mxu0 0.0
        %431 = vmatpush.msra.mxu0 0.0
        %432 = vmatpush.msra.mxu0 0.0
        %433 = vmatpush.msra.mxu0 0.0
        %434 = vmatpush.msra.mxu0 0.0
        %435 = vmatpush.msra.mxu0 0.0
        %436 = vmatpush.msra.mxu0 0.0
        %v437 = vsub.f32 %v127, %v127
        %v438 = vand.u32 %v437, 4294901760
        %439 = vmatpush.msra.mxu0 %v438
        %v440 = vsub.f32 %v126, %v126
        %v441 = vand.u32 %v440, 4294901760
        %442 = vmatpush.msra.mxu0 %v441
        %v443 = vand.u32 %v138, 4294901760
        %444 = vmatmul.f32.gmra.mxu0 %v443
        %v445 = vpop.f32.mrf.mxu0
        %v446 = vadd.f32 %v379, %v445
        %v447 = vand.u32 %v141, 4294901760
        %448 = vmatmul.f32.gmra.mxu0 %v447
        %v449 = vpop.f32.mrf.mxu0
        %v450 = vadd.f32 %v385, %v449
        %v451 = vand.u32 %v144, 4294901760
        %452 = vmatmul.f32.gmra.mxu0 %v451
        %v453 = vpop.f32.mrf.mxu0
        %v454 = vadd.f32 %v391, %v453
        %v455 = vand.u32 %v147, 4294901760
        %456 = vmatmul.f32.gmra.mxu0 %v455
        %v457 = vpop.f32.mrf.mxu0
        %v458 = vadd.f32 %v397, %v457
        %v459 = vand.u32 %v150, 4294901760
        %460 = vmatmul.f32.gmra.mxu0 %v459
        %v461 = vpop.f32.mrf.mxu0
        %v462 = vadd.f32 %v403, %v461
        %v463 = vand.u32 %v153, 4294901760
        %464 = vmatmul.f32.gmra.mxu0 %v463
        %v465 = vpop.f32.mrf.mxu0
        %v466 = vadd.f32 %v409, %v465
        %v467 = vand.u32 %v156, 4294901760
        %468 = vmatmul.f32.gmra.mxu0 %v467
        %v469 = vpop.f32.mrf.mxu0
        %v470 = vadd.f32 %v415, %v469
        %v471 = vand.u32 %v159, 4294901760
        %472 = vmatmul.f32.gmra.mxu0 %v471
        %v473 = vpop.f32.mrf.mxu0
        %v474 = vadd.f32 %v421, %v473
        %475 = vdwg.mxu0
        %476 = vmatpush.msra.mxu0 0.0
        %477 = vmatpush.msra.mxu0 0.0
        %478 = vmatpush.msra.mxu0 0.0
        %479 = vmatpush.msra.mxu0 0.0
        %480 = vmatpush.msra.mxu0 0.0
        %481 = vmatpush.msra.mxu0 0.0
        %482 = vmatpush.msra.mxu0 0.0
        %483 = vmatpush.msra.mxu0 0.0
        %484 = vmatpush.msra.mxu0 0.0
        %485 = vmatpush.msra.mxu0 0.0
        %486 = vmatpush.msra.mxu0 0.0
        %487 = vmatpush.msra.mxu0 0.0
        %488 = vmatpush.msra.mxu0 0.0
        %489 = vmatpush.msra.mxu0 0.0
        %490 = vmatpush.msra.mxu0 %v127
        %491 = vmatpush.msra.mxu0 %v126
        %v492 = vand.u32 %v138, 4294901760
        %493 = vmatmul.f32.gmra.mxu0 %v492
        %v494 = vpop.f32.mrf.mxu0
        %v495 = vadd.f32 %v446, %v494
        %v496 = vand.u32 %v141, 4294901760
        %497 = vmatmul.f32.gmra.mxu0 %v496
        %v498 = vpop.f32.mrf.mxu0
        %v499 = vadd.f32 %v450, %v498
        %v500 = vand.u32 %v144, 4294901760
        %501 = vmatmul.f32.gmra.mxu0 %v500
        %v502 = vpop.f32.mrf.mxu0
        %v503 = vadd.f32 %v454, %v502
        %v504 = vand.u32 %v147, 4294901760
        %505 = vmatmul.f32.gmra.mxu0 %v504
        %v506 = vpop.f32.mrf.mxu0
        %v507 = vadd.f32 %v458, %v506
        %v508 = vand.u32 %v150, 4294901760
        %509 = vmatmul.f32.gmra.mxu0 %v508
        %v510 = vpop.f32.mrf.mxu0
        %v511 = vadd.f32 %v462, %v510
        %v512 = vand.u32 %v153, 4294901760
        %513 = vmatmul.f32.gmra.mxu0 %v512
        %v514 = vpop.f32.mrf.mxu0
        %v515 = vadd.f32 %v466, %v514
        %v516 = vand.u32 %v156, 4294901760
        %517 = vmatmul.f32.gmra.mxu0 %v516
        %v518 = vpop.f32.mrf.mxu0
        %v519 = vadd.f32 %v470, %v518
        %v520 = vand.u32 %v159, 4294901760
        %521 = vmatmul.f32.gmra.mxu0 %v520
        %v522 = vpop.f32.mrf.mxu0
        %v523 = vadd.f32 %v474, %v522
        %524 = vdwg.mxu0
        %525 = vst.msk [vmem:[%s110] sm:$0xff] %vm136, %v495
        %526 = vst.msk [vmem:[%s110 + $0x8] sm:$0xff] %vm136, %v499
        %527 = vst.msk [vmem:[%s110 + $0x10] sm:$0xff] %vm136, %v503
        %528 = vst.msk [vmem:[%s110 + $0x18] sm:$0xff] %vm136, %v507
        %529 = vst.msk [vmem:[%s110 + $0x20] sm:$0xff] %vm136, %v511
        %530 = vst.msk [vmem:[%s110 + $0x28] sm:$0xff] %vm136, %v515
        %531 = vst.msk [vmem:[%s110 + $0x30] sm:$0xff] %vm136, %v519
        %532 = vst.msk [vmem:[%s110 + $0x38] sm:$0xff] %vm136, %v523
        %s533 = sand.u32 %s49, 1
        %s534 = scalar_lea.sflag [#allocation3], %s533
        %s535 = sand.u32 %s49, 1
        %s536 = smul.addr %s535, 64
        %s537 = scalar_lea.vmem [#allocation2], %s536
        // Predicated region
        $region25: #{branch_1_fun.2} parent=23 // pred_check
          %p538 = pneg %p59
        $region26: #{branch_1_fun.2} parent=23 // pred_check_branch
          %540 = sbr.rel (%p538) target = $region28
        $region27: #{branch_1_fun.2} parent=23 // pred_region
          %s541 = smul.u32 8, %s15
          %543 = vsyncadd %s534, 0
          %s544 = smul.addr %s541, 8
          %s545 = scalar_lea.hbm %s1, %s544
          %s546 = sshll.u32 %s537, 4
          %s547 = int_to_ptr.vmem [resolvable:$true] %s546
          %s548 = sshll.u32 %s545, 4
          %s549 = int_to_ptr.hbm [resolvable:$true] %s548
          %554 = dma.vmem_to_hbm [thread:$0]  %s547, 1024, %s549, %s534, 128, 128, 8
        $region28: #{branch_1_fun.2} parent=23 // pred_fallthru
          _
      $region24: #{branch_1_fun.2} parent=5 // pred_fallthru
        _
      %p555 = scmp.le.s32.totalorder 2, %s10
      // Predicated region
      $region29: #{branch_1_fun.2} parent=5 // pred_check
        %p556 = pneg %p555
      $region30: #{branch_1_fun.2} parent=5 // pred_check_branch
        %558 = sbr.rel (%p556) target = $region32
      $region31: #{branch_1_fun.2} parent=5 // pred_region
        %s559 = ssub.s32 %s10, 2
        // Predicated region
        $region33: #{branch_1_fun.2} parent=31 // pred_check
          %p560 = pneg %p65
        $region34: #{branch_1_fun.2} parent=31 // pred_check_branch
          %562 = sbr.rel (%p560) target = $region36
        $region35: #{branch_1_fun.2} parent=31 // pred_region
          %s563 = sand.u32 %s50, 1
          %s564 = scalar_lea.sflag [#allocation3], %s563
          %s565 = sand.u32 %s50, 1
          %s566 = smul.addr %s565, 64
          %s567 = scalar_lea.vmem [#allocation2], %s566
          %569 = dma.done %s564, 1024
        $region36: #{branch_1_fun.2} parent=31 // pred_fallthru
          _
      $region32: #{branch_1_fun.2} parent=5 // pred_fallthru
        _
    $region6: #{branch_1_fun.2} parent=1 // loop_footer
      %s14 = sadd.s32 1, %s10
    $region7: #{branch_1_fun.2} parent=1 // loop_footer_branch
      %9 = sbr.rel target = $region3
    $region8: #{branch_1_fun.2} parent=1 // loop_exit
      _
    %570 = vsyncpa [#allocation3], 1
    %s571 = scalar_lea.sflag [#allocation3], 1
    %572 = vsyncpa %s571, 1

</llo_original>
